<compile_context>
chip_gen: v7x
topology: tpu7x:2x2x1
jax: 0.10.0
libtpu: 0.0.40
codegen_flags: <defaults>
</compile_context>

<pallas_src>
import functools

import jax
import jax.numpy as jnp
from jax.experimental import pallas as pl
from jax.experimental.pallas import tpu as pltpu


def _vq_kernel(hw, z_ref, esq_ref, emb_hbm, et_hbm,
               zq_ref, idx_ref, loss_ref, cnt_ref,
               emb_vmem, et_vmem, copy_sem):
    """One (batch image, pixel tile): nearest-code lookup, quantized values, loss/counts.

    z_ref   : (1, e_dim, t_hw) f32  input pixels (channels on sublanes, pixels on lanes)
    esq_ref : (n_e, 1)         f32  ||e||^2 per code (hoisted in the wrapper)
    emb_hbm : (n_e, e_dim)     bf16 codebook in HBM (copied once -> emb_vmem)
    et_hbm  : (3, e_dim, n_e)  bf16 3-term bf16 split of codebook^T (copied once -> et_vmem)
    zq_ref  : (1, e_dim, t_hw) f32  quantized pixels
    idx_ref : (1, 1, t_hw)     i32  argmin code indices (lane-dense)
    loss_ref: (1, 1)           f32  running sum of (z_q - z)^2 over valid pixels
    cnt_ref : (n_e, 1)         f32  running per-code usage counts
    emb_vmem/et_vmem           bf16 single-buffered resident VMEM copies of the codebook
    """
    b = pl.program_id(0)
    j = pl.program_id(1)
    n_e = emb_vmem.shape[0]
    t_hw = z_ref.shape[-1]

    first = jnp.logical_and(b == 0, j == 0)

    @pl.when(first)
    def _():
        # Codebook is grid-invariant: fetch it exactly once, single-buffered (default
        # BlockSpec pipelining would allocate 2x VMEM for arrays that never change).
        cp0 = pltpu.make_async_copy(emb_hbm, emb_vmem, copy_sem.at[0])
        cp1 = pltpu.make_async_copy(et_hbm, et_vmem, copy_sem.at[1])
        cp0.start()
        cp1.start()
        cp0.wait()
        cp1.wait()
        loss_ref[...] = jnp.zeros_like(loss_ref)
        cnt_ref[...] = jnp.zeros_like(cnt_ref)

    z = z_ref[0]                                              # (e_dim, t_hw) f32

    # d^T = ||z||^2 + ||e||^2 - 2 e.z  -> (n_e, t_hw).  Only the argmin ranking matters,
    # so a single bf16 MXU pass is used for the cross term.
    # TODO(synk): if exact index parity with an f32 reference is required (trained
    # codebooks with near-tied codes), split z/emb into bf16 hi/lo terms (2-3 passes).
    z_sq = jnp.sum(z * z, axis=0, keepdims=True)              # (1, t_hw)
    cross = jnp.dot(emb_vmem[...], z.astype(jnp.bfloat16),
                    preferred_element_type=jnp.float32)       # (n_e, t_hw)
    d = esq_ref[...] + z_sq - 2.0 * cross

    # first-minimal-index argmin over the codebook (matches torch.argmin tie-break)
    d_min = jnp.min(d, axis=0, keepdims=True)                 # (1, t_hw)
    row = jax.lax.broadcasted_iota(jnp.int32, d.shape, 0)     # (n_e, t_hw)
    idx = jnp.min(jnp.where(d == d_min, row, n_e),
                  axis=0, keepdims=True)                      # (1, t_hw) int32
    hit = row == idx                                          # (n_e, t_hw) one-hot mask

    # Exact gather: codebook^T reconstructed from 3 bf16 terms; the one-hot operand is
    # exact in bf16, so 3 DEFAULT MXU passes reproduce the f32 embedding rows exactly
    # (vs. 6 passes for a HIGHEST-precision matmul).
    onehot = hit.astype(jnp.bfloat16)
    z_q = (jnp.dot(et_vmem[0], onehot, preferred_element_type=jnp.float32)
           + jnp.dot(et_vmem[1], onehot, preferred_element_type=jnp.float32)
           + jnp.dot(et_vmem[2], onehot, preferred_element_type=jnp.float32))

    zq_ref[0] = z_q.astype(zq_ref.dtype)
    idx_ref[...] = idx[:, None, :]                            # (1, 1, t_hw) lane-dense

    # Mask the ragged H*W tail (no jnp.pad copy of the activations in the wrapper).
    lane = jax.lax.broadcasted_iota(jnp.int32, (1, t_hw), 1) + j * t_hw
    valid = lane < hw                                         # (1, t_hw)

    diff = jnp.where(valid, z_q - z, 0.0)                     # (e_dim, t_hw)
    loss_ref[...] += jnp.sum(diff * diff, keepdims=True)      # (1, 1)

    # Per-code usage counts on the XLU (lane reduce) -- keeps the MXU free.
    cnt_ref[...] += jnp.sum(jnp.where(jnp.logical_and(hit, valid), 1.0, 0.0),
                            axis=1, keepdims=True)            # (n_e, 1)


def _split3_bf16_t(emb_f32):
    """Split emb^T (e_dim, n_e) into three bf16 arrays whose f32 sum reconstructs it exactly."""
    et = emb_f32.T
    hi = et.astype(jnp.bfloat16)
    r1 = et - hi.astype(jnp.float32)
    mid = r1.astype(jnp.bfloat16)
    lo = (r1 - mid.astype(jnp.float32)).astype(jnp.bfloat16)
    return jnp.stack([hi, mid, lo])                           # (3, e_dim, n_e)


def vector_quantize2(z, emb, beta, *, t_hw=512):
    """Forward pass of VectorQuantize2 (legacy / non-legacy give the same forward loss value).

    Returns (z_q [NCHW], loss, indices [B*H*W int32], counts [n_e]); `counts` mirrors the
    per-code increments applied to `embedding_counter` in the PyTorch module.
    TODO(synk): forward-only -- a custom_vjp would be needed to reproduce the
    straight-through estimator and codebook/commitment gradients under jax.grad.
    """
    B, C, H, W = z.shape
    n_e, e_dim = emb.shape
    assert C == e_dim, "channel dim must equal e_dim"
    HW = H * W

    # NCHW-native: pure reshape (b c h w -> b c (h w)); channels stay on sublanes,
    # pixels go to lanes.  No transpose / pad HBM passes over the activations.
    z3 = z.reshape(B, e_dim, HW).astype(jnp.float32)

    # Codebook-invariant work hoisted out of the kernel (one-time, tiny).
    emb_f = emb.astype(jnp.float32)
    e_sq = jnp.sum(emb_f * emb_f, axis=1, keepdims=True)      # (n_e, 1)
    emb_bf16 = emb_f.astype(jnp.bfloat16)                     # distance-matmul operand
    et_split = _split3_bf16_t(emb_f)                          # (3, e_dim, n_e) exact-gather operand

    # Pixel-tile width: a multiple of 128 lanes, or the full H*W extent.
    if t_hw >= HW:
        t_hw = HW
    else:
        t_hw = max(128, (t_hw // 128) * 128)
        if t_hw >= HW:
            t_hw = HW

    # VMEM budget: streaming z/zq tiles (double-buffered) + single-buffered codebook
    # copies + live (n_e, t_hw) temporaries (d, iota, select, one-hot, cross, headroom).
    bpe = 4
    resident = 8 * n_e * e_dim + 6 * n_e * bpe + 1024
    def vmem_bytes(t):
        stream = 2 * 2 * e_dim * t * bpe + 2 * t * 4
        temps = 6 * n_e * t * bpe
        return resident + stream + temps

    try:
        vmem_cap = int(pltpu.get_tpu_info().vmem_capacity_bytes)
    except Exception:
        vmem_cap = 64 * 1024 * 1024                           # assume the smallest (v7x-like) part
    usable = int(vmem_cap * 0.8)                              # headroom for compiler scratch/spill

    while vmem_bytes(t_hw) > usable and t_hw > 128 and t_hw % 256 == 0:
        t_hw //= 2
    # TODO(synk): for huge codebooks that still exceed `usable` (large n_e on v7x), tile the
    # n_e axis with a running (min, argmin) accumulator instead of the full (n_e, t_hw) d.
    vmem_limit = int(min(usable, max(2 * vmem_bytes(t_hw), 32 * 1024 * 1024)))

    n_hw = pl.cdiv(HW, t_hw)
    kernel = functools.partial(_vq_kernel, HW)

    # TODO(synk): on v7x, shard the (B, pixel-tile) grid across both TensorCores
    # (CORE_PARALLEL / pl.core_map) with per-core loss/count accumulators.
    zq3, idx3, loss_sum, cnt_col = pl.pallas_call(
        kernel,
        grid=(B, n_hw),
        in_specs=[
            pl.BlockSpec((1, e_dim, t_hw), lambda b, j: (b, 0, j)),
            pl.BlockSpec((n_e, 1), lambda b, j: (0, 0)),      # ||e||^2, resident
            pl.BlockSpec(memory_space=pl.ANY),                # codebook (bf16), single-buffered
            pl.BlockSpec(memory_space=pl.ANY),                # codebook^T bf16 split, single-buffered
        ],
        out_specs=[
            pl.BlockSpec((1, e_dim, t_hw), lambda b, j: (b, 0, j)),
            pl.BlockSpec((1, 1, t_hw), lambda b, j: (b, 0, j)),
            pl.BlockSpec((1, 1), lambda b, j: (0, 0)),        # loss accumulator (resident)
            pl.BlockSpec((n_e, 1), lambda b, j: (0, 0)),      # count accumulator (resident)
        ],
        out_shape=[
            jax.ShapeDtypeStruct((B, e_dim, HW), jnp.float32),
            jax.ShapeDtypeStruct((B, 1, HW), jnp.int32),
            jax.ShapeDtypeStruct((1, 1), jnp.float32),
            jax.ShapeDtypeStruct((n_e, 1), jnp.float32),
        ],
        scratch_shapes=[
            pltpu.VMEM((n_e, e_dim), jnp.bfloat16),
            pltpu.VMEM((3, e_dim, n_e), jnp.bfloat16),
            pltpu.SemaphoreType.DMA((2,)),
        ],
        compiler_params=pltpu.CompilerParams(
            dimension_semantics=("arbitrary", "arbitrary"),
            vmem_limit_bytes=vmem_limit),
    )(z3, e_sq, emb_bf16, et_split)

    # zq3 is already NCHW (channels-major); forward value of the straight-through z_q.
    z_q = zq3.reshape(B, C, H, W)
    # legacy:  mean((zq.det - z)^2) + beta * mean((zq - z.det)^2)
    # !legacy: beta * mean((zq.det - z)^2) + mean((zq - z.det)^2)
    # -> identical forward value: (1 + beta) * mean((zq - z)^2)
    loss = (1.0 + beta) * loss_sum[0, 0] / (B * HW * e_dim)
    indices = idx3.reshape(-1)                                # (B*H*W,) in (b, h, w) order; int32 (torch: int64)
    counts = cnt_col[:, 0]
    # TODO(synk): remap_to_used / unmap_to_all / sane_index_shape branches (remap=None here).
    return z_q, loss, indices, counts


if __name__ == "__main__":
    key = jax.random.PRNGKey(0)
    B, C, H, W = 2, 16, 8, 8          # N = B*H*W = 128 pixels
    n_e, e_dim, beta = 64, C, 0.25

    k1, k2 = jax.random.split(key)
    z = jax.random.normal(k1, (B, C, H, W), jnp.float32)
    # nn.Embedding(n_e, e_dim).weight ~ U(-1/n_e, 1/n_e), deterministic init here
    emb = jax.random.uniform(k2, (n_e, e_dim), jnp.float32,
                             minval=-1.0 / n_e, maxval=1.0 / n_e)

    fn = jax.jit(functools.partial(vector_quantize2, beta=beta))
    z_q, loss, idx, counts = jax.block_until_ready(fn(z, emb))

    # pure-JAX reference for sanity
    zf = jnp.transpose(z, (0, 2, 3, 1)).reshape(-1, e_dim)
    d = (jnp.sum(zf ** 2, 1, keepdims=True) + jnp.sum(emb ** 2, 1)[None, :]
         - 2.0 * jnp.dot(zf, emb.T, precision=jax.lax.Precision.HIGHEST))
    ref_idx = jnp.argmin(d, axis=1)

    # chosen codes must be (numerically) as close as the exact argmin; the kernel's
    # distance matmul runs at single-bf16-pass precision, so near-ties may resolve
    # to an equally-good neighbour.
    rows = jnp.arange(d.shape[0])
    assert bool(jnp.all(d[rows, idx] <= d[rows, ref_idx] + 1e-2)), "index quality mismatch"

    # z_q must be exactly the embedding rows selected by the kernel's indices
    sel_zq = emb[idx].reshape(B, H, W, C).transpose(0, 3, 1, 2)
    assert jnp.allclose(z_q, sel_zq, atol=1e-5, rtol=1e-5), "z_q mismatch"

    # forward loss: (1 + beta) * mean((z_q - z)^2)
    ref_loss = (1.0 + beta) * jnp.mean((sel_zq - z) ** 2)
    assert jnp.allclose(loss, ref_loss, atol=1e-5, rtol=1e-5), "loss mismatch"

    # per-code usage counts (embedding_counter analogue) match a bincount exactly
    ref_counts = jnp.bincount(idx, length=n_e).astype(jnp.float32)
    assert jnp.array_equal(counts, ref_counts), "counter mismatch"
    assert int(jnp.sum(counts)) == B * H * W, "counter total mismatch"

    print("KERNEL_OK")
</pallas_src>

<mosaic_0001>
module attributes {stable_mosaic.version = 11 : i64} {
  func.func @_vq_kernel(%arg0: i32, %arg1: i32, %arg2: memref<1x16x64xf32, #tpu.memory_space<vmem>>, %arg3: memref<64x1xf32, #tpu.memory_space<vmem>>, %arg4: memref<64x16xbf16, #tpu.memory_space<any>>, %arg5: memref<3x16x64xbf16, #tpu.memory_space<any>>, %arg6: memref<1x16x64xf32, #tpu.memory_space<vmem>>, %arg7: memref<1x1x64xi32, #tpu.memory_space<vmem>>, %arg8: memref<1x1xf32, #tpu.memory_space<vmem>>, %arg9: memref<64x1xf32, #tpu.memory_space<vmem>>, %arg10: memref<64x16xbf16, #tpu.memory_space<vmem>>, %arg11: memref<3x16x64xbf16, #tpu.memory_space<vmem>>, %arg12: memref<2x!tpu.dma_semaphore, #tpu.memory_space<semaphore_mem>>) attributes {dimension_semantics = [#tpu.dimension_semantics<arbitrary>, #tpu.dimension_semantics<arbitrary>], iteration_bounds = array<i64: 2, 1>, scalar_prefetch = 0 : i64, scratch_operands = 3 : i64, tpu.core_type = #tpu.core_type<tc>, window_params = [{transform_indices = @transform_0, window_bounds = array<i64: 1, 16, 64>}, {pipeline_mode = #tpu.pipeline_mode<synchronous>, transform_indices = @transform_1, window_bounds = array<i64: 64, 1>}, {}, {}, {transform_indices = @transform_4, window_bounds = array<i64: 1, 16, 64>}, {transform_indices = @transform_5, window_bounds = array<i64: 1, 1, 64>}, {pipeline_mode = #tpu.pipeline_mode<synchronous>, transform_indices = @transform_6, window_bounds = array<i64: 1, 1>}, {pipeline_mode = #tpu.pipeline_mode<synchronous>, transform_indices = @transform_7, window_bounds = array<i64: 64, 1>}]} {
    %c0_i32 = arith.constant 0 : i32
    %0 = arith.cmpi eq, %arg0, %c0_i32 : i32
    %c0_i32_0 = arith.constant 0 : i32
    %1 = arith.cmpi eq, %arg1, %c0_i32_0 : i32
    %2 = arith.andi %0, %1 : i1
    %3 = arith.extui %2 : i1 to i32
    %c0_i32_1 = arith.constant 0 : i32
    %4 = arith.cmpi ne, %3, %c0_i32_1 : i32
    scf.if %4 {
      %c0_i32_43 = arith.constant 0 : i32
      %80 = tpu.memref_slice %arg12[%c0_i32_43] : memref<2x!tpu.dma_semaphore, #tpu.memory_space<semaphore_mem>> -> memref<1x!tpu.dma_semaphore, #tpu.memory_space<semaphore_mem>>
      %81 = tpu.memref_squeeze %80 : memref<1x!tpu.dma_semaphore, #tpu.memory_space<semaphore_mem>> -> memref<!tpu.dma_semaphore, #tpu.memory_space<semaphore_mem>>
      tpu.enqueue_dma source(%arg4 : memref<64x16xbf16, #tpu.memory_space<any>>) target(%arg10 : memref<64x16xbf16, #tpu.memory_space<vmem>>) target_semaphore(%81 : memref<!tpu.dma_semaphore, #tpu.memory_space<semaphore_mem>>)
      %c1_i32 = arith.constant 1 : i32
      %82 = tpu.memref_slice %arg12[%c1_i32] : memref<2x!tpu.dma_semaphore, #tpu.memory_space<semaphore_mem>> -> memref<1x!tpu.dma_semaphore, #tpu.memory_space<semaphore_mem>>
      %83 = tpu.memref_squeeze %82 : memref<1x!tpu.dma_semaphore, #tpu.memory_space<semaphore_mem>> -> memref<!tpu.dma_semaphore, #tpu.memory_space<semaphore_mem>>
      tpu.enqueue_dma source(%arg5 : memref<3x16x64xbf16, #tpu.memory_space<any>>) target(%arg11 : memref<3x16x64xbf16, #tpu.memory_space<vmem>>) target_semaphore(%83 : memref<!tpu.dma_semaphore, #tpu.memory_space<semaphore_mem>>)
      %c0_i32_44 = arith.constant 0 : i32
      %84 = tpu.memref_slice %arg12[%c0_i32_44] : memref<2x!tpu.dma_semaphore, #tpu.memory_space<semaphore_mem>> -> memref<1x!tpu.dma_semaphore, #tpu.memory_space<semaphore_mem>>
      %85 = tpu.memref_squeeze %84 : memref<1x!tpu.dma_semaphore, #tpu.memory_space<semaphore_mem>> -> memref<!tpu.dma_semaphore, #tpu.memory_space<semaphore_mem>>
      tpu.wait_dma2 semaphore(%85 : memref<!tpu.dma_semaphore, #tpu.memory_space<semaphore_mem>>) src(%arg4 : memref<64x16xbf16, #tpu.memory_space<any>>) dst(%arg10 : memref<64x16xbf16, #tpu.memory_space<vmem>>)
      %c1_i32_45 = arith.constant 1 : i32
      %86 = tpu.memref_slice %arg12[%c1_i32_45] : memref<2x!tpu.dma_semaphore, #tpu.memory_space<semaphore_mem>> -> memref<1x!tpu.dma_semaphore, #tpu.memory_space<semaphore_mem>>
      %87 = tpu.memref_squeeze %86 : memref<1x!tpu.dma_semaphore, #tpu.memory_space<semaphore_mem>> -> memref<!tpu.dma_semaphore, #tpu.memory_space<semaphore_mem>>
      tpu.wait_dma2 semaphore(%87 : memref<!tpu.dma_semaphore, #tpu.memory_space<semaphore_mem>>) src(%arg5 : memref<3x16x64xbf16, #tpu.memory_space<any>>) dst(%arg11 : memref<3x16x64xbf16, #tpu.memory_space<vmem>>)
      %cst_46 = arith.constant 0.000000e+00 : f32
      %88 = vector.broadcast %cst_46 : f32 to vector<1x1xf32>
      %c0_47 = arith.constant 0 : index
      %c0_48 = arith.constant 0 : index
      %89 = vector.load %arg8[%c0_47, %c0_48] : memref<1x1xf32, #tpu.memory_space<vmem>>, vector<1x1xf32>
      tpu.vector_store %arg8[%c0_47, %c0_48], %88 {strides = array<i32>} : memref<1x1xf32, #tpu.memory_space<vmem>>, vector<1x1xf32>,
      %cst_49 = arith.constant 0.000000e+00 : f32
      %90 = vector.broadcast %cst_49 : f32 to vector<64x1xf32>
      %c0_50 = arith.constant 0 : index
      %c0_51 = arith.constant 0 : index
      %91 = vector.load %arg9[%c0_50, %c0_51] : memref<64x1xf32, #tpu.memory_space<vmem>>, vector<64x1xf32>
      tpu.vector_store %arg9[%c0_50, %c0_51], %90 {strides = array<i32>} : memref<64x1xf32, #tpu.memory_space<vmem>>, vector<64x1xf32>,
    } else {
    }
    %c0 = arith.constant 0 : index
    %c0_2 = arith.constant 0 : index
    %c0_3 = arith.constant 0 : index
    %5 = vector.load %arg2[%c0, %c0_2, %c0_3] : memref<1x16x64xf32, #tpu.memory_space<vmem>>, vector<1x16x64xf32>
    %6 = vector.shape_cast %5 : vector<1x16x64xf32> to vector<16x64xf32>
    %7 = arith.mulf %6, %6 : vector<16x64xf32>
    %cst = arith.constant dense<0.000000e+00> : vector<64xf32>
    %8 = vector.multi_reduction <add>, %7, %cst [0] : vector<16x64xf32> to vector<64xf32>
    %9 = vector.shape_cast %8 : vector<64xf32> to vector<1x64xf32>
    %c0_4 = arith.constant 0 : index
    %c0_5 = arith.constant 0 : index
    %10 = vector.load %arg10[%c0_4, %c0_5] : memref<64x16xbf16, #tpu.memory_space<vmem>>, vector<64x16xbf16>
    %11 = arith.truncf %6 : vector<16x64xf32> to vector<16x64xbf16>
    %cst_6 = arith.constant dense<0.000000e+00> : vector<64x64xf32>
    %12 = tpu.matmul %10, %11, %cst_6 {dimension_numbers = #tpu.dot_dimension_numbers<[1], [0], [0], [1], [0, 0, 1, 1], [], []>} : vector<64x16xbf16>, vector<16x64xbf16>, vector<64x64xf32> -> vector<64x64xf32>
    %c0_7 = arith.constant 0 : index
    %c0_8 = arith.constant 0 : index
    %13 = vector.load %arg3[%c0_7, %c0_8] : memref<64x1xf32, #tpu.memory_space<vmem>>, vector<64x1xf32>
    %14 = vector.broadcast %13 : vector<64x1xf32> to vector<64x64xf32>
    %15 = vector.broadcast %9 : vector<1x64xf32> to vector<64x64xf32>
    %16 = arith.addf %14, %15 : vector<64x64xf32>
    %cst_9 = arith.constant 2.000000e+00 : f32
    %17 = vector.broadcast %cst_9 : f32 to vector<64x64xf32>
    %18 = arith.mulf %17, %12 : vector<64x64xf32>
    %19 = arith.subf %16, %18 : vector<64x64xf32>
    %cst_10 = arith.constant dense<0x7F800000> : vector<64xf32>
    %20 = vector.multi_reduction <minimumf>, %19, %cst_10 [0] : vector<64x64xf32> to vector<64xf32>
    %21 = vector.shape_cast %20 : vector<64xf32> to vector<1x64xf32>
    %22 = tpu.iota {dimensions = array<i32: 0>} : vector<64x64xi32>
    %23 = vector.broadcast %21 : vector<1x64xf32> to vector<64x64xf32>
    %24 = arith.cmpf oeq, %19, %23 : vector<64x64xf32>
    %c64_i32 = arith.constant 64 : i32
    %25 = vector.broadcast %c64_i32 : i32 to vector<64x64xi32>
    %26 = arith.select %24, %22, %25 : vector<64x64xi1>, vector<64x64xi32>
    %cst_11 = arith.constant dense<2147483647> : vector<64xi32>
    %27 = vector.multi_reduction <minsi>, %26, %cst_11 [0] : vector<64x64xi32> to vector<64xi32>
    %28 = vector.shape_cast %27 : vector<64xi32> to vector<1x64xi32>
    %29 = vector.broadcast %28 : vector<1x64xi32> to vector<64x64xi32>
    %30 = arith.cmpi eq, %22, %29 : vector<64x64xi32>
    %31 = arith.extui %30 : vector<64x64xi1> to vector<64x64xi32>
    %32 = arith.sitofp %31 : vector<64x64xi32> to vector<64x64xf32>
    %33 = arith.truncf %32 : vector<64x64xf32> to vector<64x64xbf16>
    %c0_12 = arith.constant 0 : index
    %c0_13 = arith.constant 0 : index
    %c0_14 = arith.constant 0 : index
    %34 = vector.load %arg11[%c0_12, %c0_13, %c0_14] : memref<3x16x64xbf16, #tpu.memory_space<vmem>>, vector<1x16x64xbf16>
    %35 = vector.shape_cast %34 : vector<1x16x64xbf16> to vector<16x64xbf16>
    %cst_15 = arith.constant dense<0.000000e+00> : vector<16x64xf32>
    %36 = tpu.matmul %35, %33, %cst_15 {dimension_numbers = #tpu.dot_dimension_numbers<[1], [0], [0], [1], [0, 0, 1, 1], [], []>} : vector<16x64xbf16>, vector<64x64xbf16>, vector<16x64xf32> -> vector<16x64xf32>
    %c1 = arith.constant 1 : index
    %c0_16 = arith.constant 0 : index
    %c0_17 = arith.constant 0 : index
    %37 = vector.load %arg11[%c1, %c0_16, %c0_17] : memref<3x16x64xbf16, #tpu.memory_space<vmem>>, vector<1x16x64xbf16>
    %38 = vector.shape_cast %37 : vector<1x16x64xbf16> to vector<16x64xbf16>
    %cst_18 = arith.constant dense<0.000000e+00> : vector<16x64xf32>
    %39 = tpu.matmul %38, %33, %cst_18 {dimension_numbers = #tpu.dot_dimension_numbers<[1], [0], [0], [1], [0, 0, 1, 1], [], []>} : vector<16x64xbf16>, vector<64x64xbf16>, vector<16x64xf32> -> vector<16x64xf32>
    %40 = arith.addf %36, %39 : vector<16x64xf32>
    %c2 = arith.constant 2 : index
    %c0_19 = arith.constant 0 : index
    %c0_20 = arith.constant 0 : index
    %41 = vector.load %arg11[%c2, %c0_19, %c0_20] : memref<3x16x64xbf16, #tpu.memory_space<vmem>>, vector<1x16x64xbf16>
    %42 = vector.shape_cast %41 : vector<1x16x64xbf16> to vector<16x64xbf16>
    %cst_21 = arith.constant dense<0.000000e+00> : vector<16x64xf32>
    %43 = tpu.matmul %42, %33, %cst_21 {dimension_numbers = #tpu.dot_dimension_numbers<[1], [0], [0], [1], [0, 0, 1, 1], [], []>} : vector<16x64xbf16>, vector<64x64xbf16>, vector<16x64xf32> -> vector<16x64xf32>
    %44 = arith.addf %40, %43 : vector<16x64xf32>
    %c0_22 = arith.constant 0 : index
    %c0_23 = arith.constant 0 : index
    %c0_24 = arith.constant 0 : index
    %45 = vector.load %arg6[%c0_22, %c0_23, %c0_24] : memref<1x16x64xf32, #tpu.memory_space<vmem>>, vector<1x16x64xf32>
    %46 = vector.shape_cast %45 : vector<1x16x64xf32> to vector<16x64xf32>
    %47 = vector.shape_cast %44 : vector<16x64xf32> to vector<1x16x64xf32>
    tpu.vector_store %arg6[%c0_22, %c0_23, %c0_24], %47 {strides = array<i32>} : memref<1x16x64xf32, #tpu.memory_space<vmem>>, vector<1x16x64xf32>,
    %48 = vector.shape_cast %28 : vector<1x64xi32> to vector<1x1x64xi32>
    %c0_25 = arith.constant 0 : index
    %c0_26 = arith.constant 0 : index
    %c0_27 = arith.constant 0 : index
    %49 = vector.load %arg7[%c0_25, %c0_26, %c0_27] : memref<1x1x64xi32, #tpu.memory_space<vmem>>, vector<1x1x64xi32>
    tpu.vector_store %arg7[%c0_25, %c0_26, %c0_27], %48 {strides = array<i32>} : memref<1x1x64xi32, #tpu.memory_space<vmem>>, vector<1x1x64xi32>,
    %50 = tpu.iota {dimensions = array<i32: 1>} : vector<1x64xi32>
    %c64_i32_28 = arith.constant 64 : i32
    %51 = arith.muli %arg1, %c64_i32_28 : i32
    %52 = vector.broadcast %51 : i32 to vector<1x64xi32>
    %53 = arith.addi %50, %52 : vector<1x64xi32>
    %c64_i32_29 = arith.constant 64 : i32
    %54 = vector.broadcast %c64_i32_29 : i32 to vector<1x64xi32>
    %55 = arith.cmpi slt, %53, %54 : vector<1x64xi32>
    %56 = arith.subf %44, %6 : vector<16x64xf32>
    %cst_30 = arith.constant 0.000000e+00 : f32
    %57 = vector.shape_cast %55 : vector<1x64xi1> to vector<1x64xi1>
    %58 = vector.broadcast %57 : vector<1x64xi1> to vector<16x64xi1>
    %59 = vector.broadcast %cst_30 : f32 to vector<16x64xf32>
    %60 = arith.select %58, %56, %59 : vector<16x64xi1>, vector<16x64xf32>
    %c0_31 = arith.constant 0 : index
    %c0_32 = arith.constant 0 : index
    %61 = vector.load %arg8[%c0_31, %c0_32] : memref<1x1xf32, #tpu.memory_space<vmem>>, vector<1x1xf32>
    %62 = arith.mulf %60, %60 : vector<16x64xf32>
    %63 = vector.shape_cast %62 : vector<16x64xf32> to vector<1x16x64xf32>
    %cst_33 = arith.constant dense<0.000000e+00> : vector<1xf32>
    %64 = vector.multi_reduction <add>, %63, %cst_33 [1, 2] : vector<1x16x64xf32> to vector<1xf32>
    %65 = vector.shape_cast %64 : vector<1xf32> to vector<1x1x1xf32>
    %66 = vector.extract %65[0, 0, 0] : f32 from vector<1x1x1xf32>
    %67 = vector.broadcast %66 : f32 to vector<1x1xf32>
    %68 = arith.addf %61, %67 : vector<1x1xf32>
    %c0_34 = arith.constant 0 : index
    %c0_35 = arith.constant 0 : index
    %69 = vector.load %arg8[%c0_34, %c0_35] : memref<1x1xf32, #tpu.memory_space<vmem>>, vector<1x1xf32>
    tpu.vector_store %arg8[%c0_34, %c0_35], %68 {strides = array<i32>} : memref<1x1xf32, #tpu.memory_space<vmem>>, vector<1x1xf32>,
    %c0_36 = arith.constant 0 : index
    %c0_37 = arith.constant 0 : index
    %70 = vector.load %arg9[%c0_36, %c0_37] : memref<64x1xf32, #tpu.memory_space<vmem>>, vector<64x1xf32>
    %71 = vector.broadcast %55 : vector<1x64xi1> to vector<64x64xi1>
    %72 = arith.andi %30, %71 : vector<64x64xi1>
    %cst_38 = arith.constant 1.000000e+00 : f32
    %cst_39 = arith.constant 0.000000e+00 : f32
    %73 = vector.broadcast %cst_38 : f32 to vector<64x64xf32>
    %74 = vector.broadcast %cst_39 : f32 to vector<64x64xf32>
    %75 = arith.select %72, %73, %74 : vector<64x64xi1>, vector<64x64xf32>
    %cst_40 = arith.constant dense<0.000000e+00> : vector<64xf32>
    %76 = vector.multi_reduction <add>, %75, %cst_40 [1] : vector<64x64xf32> to vector<64xf32>
    %77 = vector.shape_cast %76 : vector<64xf32> to vector<64x1xf32>
    %78 = arith.addf %70, %77 : vector<64x1xf32>
    %c0_41 = arith.constant 0 : index
    %c0_42 = arith.constant 0 : index
    %79 = vector.load %arg9[%c0_41, %c0_42] : memref<64x1xf32, #tpu.memory_space<vmem>>, vector<64x1xf32>
    tpu.vector_store %arg9[%c0_41, %c0_42], %78 {strides = array<i32>} : memref<64x1xf32, #tpu.memory_space<vmem>>, vector<64x1xf32>,
    return
  }
  func.func @transform_0(%arg0: i32, %arg1: i32) -> (i32, i32, i32) {
    %c0_i32 = arith.constant 0 : i32
    %c0_i32_0 = arith.constant 0 : i32
    return %arg0, %c0_i32, %arg1 : i32, i32, i32
  }
  func.func @transform_1(%arg0: i32, %arg1: i32) -> (i32, i32) {
    %c0_i32 = arith.constant 0 : i32
    %c0_i32_0 = arith.constant 0 : i32
    %c0_i32_1 = arith.constant 0 : i32
    return %c0_i32, %c0_i32_0 : i32, i32
  }
  func.func @transform_4(%arg0: i32, %arg1: i32) -> (i32, i32, i32) {
    %c0_i32 = arith.constant 0 : i32
    %c0_i32_0 = arith.constant 0 : i32
    return %arg0, %c0_i32, %arg1 : i32, i32, i32
  }
  func.func @transform_5(%arg0: i32, %arg1: i32) -> (i32, i32, i32) {
    %c0_i32 = arith.constant 0 : i32
    %c0_i32_0 = arith.constant 0 : i32
    return %arg0, %c0_i32, %arg1 : i32, i32, i32
  }
  func.func @transform_6(%arg0: i32, %arg1: i32) -> (i32, i32) {
    %c0_i32 = arith.constant 0 : i32
    %c0_i32_0 = arith.constant 0 : i32
    %c0_i32_1 = arith.constant 0 : i32
    return %c0_i32, %c0_i32_0 : i32, i32
  }
  func.func @transform_7(%arg0: i32, %arg1: i32) -> (i32, i32) {
    %c0_i32 = arith.constant 0 : i32
    %c0_i32_0 = arith.constant 0 : i32
    %c0_i32_1 = arith.constant 0 : i32
    return %c0_i32, %c0_i32_0 : i32, i32
  }
}

</mosaic_0001>

<llo_original>
// kernel: vector_quantize2.1
$region0: #{vector_quantize2.1}
  #allocation0 [shape = 'u32[]', space=smem, size = 0x4, offset = 0x4, fixed_abs, tag = 'smem constant byte address 0x4 - core index']
  #allocation1 [shape = 'u32[144,128]{1,0:T(1,128)}', space=vmem, size = 0x12000, scoped, tag = 'internal scratch']
  #allocation2 [shape = 'bf16[64,16]{1,0:T(16,128)(2,1)}', space=vmem, size = 0x4000, scoped, tag = 'scratch operand']
  #allocation3 [shape = 'bf16[3,16,64]{2,1,0:T(16,128)(2,1)}', space=vmem, size = 0x3000, scoped, tag = 'scratch operand']
  #allocation4 [shape = 's32[2]{0}', space=sflag, size = 0x8, scoped, tag = 'scratch operand']
  #allocation7 [shape = 's32[]', space=sflag, size = 0x4, offset = 0, fixed_abs, tag = 'sflag constant byte address 0x0 - dummy sync flag']
  #allocation8 [shape = 's32[]', space=sflag, size = 0x4, offset = 0, fixed_abs, tag = 'sflag constant byte address 0x0 - dummy sync flag']
  %s0 = inlined_call_operand.vmem [shape: f32[2,16,64], index: 0, kind: input, shape index: {}]
  %s1 = inlined_call_operand.vmem [shape: f32[64,1], index: 1, kind: input, shape index: {}]
  %s2 = inlined_call_operand.vmem [shape: bf16[64,16], index: 2, kind: input, shape index: {}]
  %s3 = inlined_call_operand.vmem [shape: bf16[3,16,64], index: 3, kind: input, shape index: {}]
  %s4 = inlined_call_operand.vmem [shape: f32[2,16,64], index: 4, kind: output, shape index: {0}]
  %s5 = inlined_call_operand.vmem [shape: s32[2,1,64], index: 5, kind: output, shape index: {1}]
  %s6 = inlined_call_operand.hbm [shape: f32[1,1], index: 6, kind: output, shape index: {2}]
  %s7 = inlined_call_operand.vmem [shape: f32[64,1], index: 7, kind: output, shape index: {3}]
  %8 = xla_tuple %s4, %s5, %s6, %s7
  %s9 = sld [smem:[#allocation0]]
  $region137: #{vector_quantize2.1} parent=0
    _
  %s11 = ssub.s32 1, %s9
  %s12 = scalar_select 0, %s11, %s9
  $region1: #{vector_quantize2.1} parent=0
    #allocation5 [shape = 'u8[512]{0}', space=vmem, size = 0x400, scoped, tag = 'output window, operand 2, single buffered']
    #allocation6 [shape = 's32[2]{0}', space=sflag, size = 0x8, scoped, tag = 'scoped memory for vector_quantize2.1']
    %13 = vsyncpa [#allocation6], 0
    loop: start=0, step=1, limit=4
    $region2: #{vector_quantize2.1} parent=1 // loop_pre_header
      _
    $region3: #{vector_quantize2.1} parent=1 // loop_header
      %s15 = sphi 0, %s19
      %p16 = scmp.ge.s32.totalorder %s15, 4
      %s22 = sphi 0, %s34
      %s23 = sphi 0, %s30
      %s24 = sphi 0, %s22
      %s25 = sphi 0, %s23
      %s26 = sphi 0, %s24
      %s27 = sphi 0, %s25
      %s39 = sphi 0, %s41
      %s42 = sphi 0, %s39
      %s43 = sphi 0, %s42
      %s59 = sphi 0, %s43
      %s63 = sphi 0, %s63
      %s65 = sphi 0, %s63
      %s66 = sphi 0, %s65
      %s80 = sphi 0, %s66
      %s88 = sphi 0, %s90
      %s91 = sphi 0, %s88
      %s92 = sphi 0, %s91
      %s108 = sphi 0, %s92
      %s116 = sphi 0, %s118
      %s119 = sphi 0, %s116
      %s120 = sphi 0, %s119
      %s136 = sphi 0, %s120
      %s140 = sphi 0, %s140
      %s142 = sphi 0, %s140
      %s143 = sphi 0, %s142
      %s157 = sphi 0, %s143
      %s161 = sphi 0, %s161
      %s163 = sphi 0, %s161
      %s164 = sphi 0, %s163
      %s178 = sphi 0, %s164
    $region4: #{vector_quantize2.1} parent=1 // loop_header_branch
      %18 = sbr.rel (%p16) target = $region8
    $region5: #{vector_quantize2.1} parent=1 // loop_body
      %s20 = ssub.s32 %s15, 1
      %s21 = ssub.s32 %s15, 2
      %s28 = sadd.s32 1, %s23
      %p29 = scmp.ge.s32.totalorder %s28, 1
      %s30 = scalar_select %p29, 0, %s28
      %s31 = sadd.s32 1, %s22
      %s32 = scalar_select %p29, %s31, %s22
      %p33 = scmp.ge.s32.totalorder %s32, 2
      %s34 = scalar_select %p33, 0, %s32
      %s35 = ssub.s32 %s22, %s34
      %s36 = ssub.s32 %s23, %s30
      %s37 = sor.u32 %s35, %s36
      %p38 = scmp.eq.s32.totalorder %s37, 0
      %s40 = sadd.s32 %s39, 1
      %s41 = scalar_select %p38, %s39, %s40
      %p44 = pneg %p38
      %p45 = scmp.eq.s32.totalorder %s15, 1
      %p46 = por %p44, %p45
      %p47 = scmp.ne.s32.totalorder %s39, %s42
      %p48 = scmp.eq.s32.totalorder %s15, 0
      %p49 = por %p47, %p48
      %p50 = scmp.ne.s32.totalorder %s39, %s42
      %p51 = scmp.eq.s32.totalorder %s20, 1
      %p52 = por %p50, %p51
      %p53 = scmp.ne.s32.totalorder %s42, %s43
      %p54 = scmp.eq.s32.totalorder %s20, 0
      %p55 = por %p53, %p54
      %p56 = scmp.ne.s32.totalorder %s42, %s43
      %p57 = scmp.eq.s32.totalorder %s21, 1
      %p58 = por %p56, %p57
      %p60 = scmp.ne.s32.totalorder %s43, %s59
      %p61 = scmp.eq.s32.totalorder %s21, 0
      %p62 = por %p60, %p61
      %s64 = sadd.s32 %s63, 1
      %p67 = scmp.eq.s32.totalorder %s15, 1
      %p68 = scmp.ne.s32.totalorder %s63, %s65
      %p69 = scmp.eq.s32.totalorder %s15, 0
      %p70 = por %p68, %p69
      %p71 = scmp.ne.s32.totalorder %s63, %s65
      %p72 = scmp.eq.s32.totalorder %s20, 1
      %p73 = por %p71, %p72
      %p74 = scmp.ne.s32.totalorder %s65, %s66
      %p75 = scmp.eq.s32.totalorder %s20, 0
      %p76 = por %p74, %p75
      %p77 = scmp.ne.s32.totalorder %s65, %s66
      %p78 = scmp.eq.s32.totalorder %s21, 1
      %p79 = por %p77, %p78
      %p81 = scmp.ne.s32.totalorder %s66, %s80
      %p82 = scmp.eq.s32.totalorder %s21, 0
      %p83 = por %p81, %p82
      %s84 = ssub.s32 %s22, %s34
      %s85 = ssub.s32 %s23, %s30
      %s86 = sor.u32 %s84, %s85
      %p87 = scmp.eq.s32.totalorder %s86, 0
      %s89 = sadd.s32 %s88, 1
      %s90 = scalar_select %p87, %s88, %s89
      %p93 = pneg %p87
      %p94 = scmp.eq.s32.totalorder %s15, 1
      %p95 = por %p93, %p94
      %p96 = scmp.ne.s32.totalorder %s88, %s91
      %p97 = scmp.eq.s32.totalorder %s15, 0
      %p98 = por %p96, %p97
      %p99 = scmp.ne.s32.totalorder %s88, %s91
      %p100 = scmp.eq.s32.totalorder %s20, 1
      %p101 = por %p99, %p100
      %p102 = scmp.ne.s32.totalorder %s91, %s92
      %p103 = scmp.eq.s32.totalorder %s20, 0
      %p104 = por %p102, %p103
      %p105 = scmp.ne.s32.totalorder %s91, %s92
      %p106 = scmp.eq.s32.totalorder %s21, 1
      %p107 = por %p105, %p106
      %p109 = scmp.ne.s32.totalorder %s92, %s108
      %p110 = scmp.eq.s32.totalorder %s21, 0
      %p111 = por %p109, %p110
      %s112 = ssub.s32 %s22, %s34
      %s113 = ssub.s32 %s23, %s30
      %s114 = sor.u32 %s112, %s113
      %p115 = scmp.eq.s32.totalorder %s114, 0
      %s117 = sadd.s32 %s116, 1
      %s118 = scalar_select %p115, %s116, %s117
      %p121 = pneg %p115
      %p122 = scmp.eq.s32.totalorder %s15, 1
      %p123 = por %p121, %p122
      %p124 = scmp.ne.s32.totalorder %s116, %s119
      %p125 = scmp.eq.s32.totalorder %s15, 0
      %p126 = por %p124, %p125
      %p127 = scmp.ne.s32.totalorder %s116, %s119
      %p128 = scmp.eq.s32.totalorder %s20, 1
      %p129 = por %p127, %p128
      %p130 = scmp.ne.s32.totalorder %s119, %s120
      %p131 = scmp.eq.s32.totalorder %s20, 0
      %p132 = por %p130, %p131
      %p133 = scmp.ne.s32.totalorder %s119, %s120
      %p134 = scmp.eq.s32.totalorder %s21, 1
      %p135 = por %p133, %p134
      %p137 = scmp.ne.s32.totalorder %s120, %s136
      %p138 = scmp.eq.s32.totalorder %s21, 0
      %p139 = por %p137, %p138
      %s141 = sadd.s32 %s140, 1
      %p144 = scmp.eq.s32.totalorder %s15, 1
      %p145 = scmp.ne.s32.totalorder %s140, %s142
      %p146 = scmp.eq.s32.totalorder %s15, 0
      %p147 = por %p145, %p146
      %p148 = scmp.ne.s32.totalorder %s140, %s142
      %p149 = scmp.eq.s32.totalorder %s20, 1
      %p150 = por %p148, %p149
      %p151 = scmp.ne.s32.totalorder %s142, %s143
      %p152 = scmp.eq.s32.totalorder %s20, 0
      %p153 = por %p151, %p152
      %p154 = scmp.ne.s32.totalorder %s142, %s143
      %p155 = scmp.eq.s32.totalorder %s21, 1
      %p156 = por %p154, %p155
      %p158 = scmp.ne.s32.totalorder %s143, %s157
      %p159 = scmp.eq.s32.totalorder %s21, 0
      %p160 = por %p158, %p159
      %s162 = sadd.s32 %s161, 1
      %p165 = scmp.eq.s32.totalorder %s15, 1
      %p166 = scmp.ne.s32.totalorder %s161, %s163
      %p167 = scmp.eq.s32.totalorder %s15, 0
      %p168 = por %p166, %p167
      %p169 = scmp.ne.s32.totalorder %s161, %s163
      %p170 = scmp.eq.s32.totalorder %s20, 1
      %p171 = por %p169, %p170
      %p172 = scmp.ne.s32.totalorder %s163, %s164
      %p173 = scmp.eq.s32.totalorder %s20, 0
      %p174 = por %p172, %p173
      %p175 = scmp.ne.s32.totalorder %s163, %s164
      %p176 = scmp.eq.s32.totalorder %s21, 1
      %p177 = por %p175, %p176
      %p179 = scmp.ne.s32.totalorder %s164, %s178
      %p180 = scmp.eq.s32.totalorder %s21, 0
      %p181 = por %p179, %p180
      %p182 = scmp.le.s32.totalorder 1, %s15
      %p183 = scmp.lt.s32.totalorder %s15, 3
      %p184 = pnand %p182, %p183
      %p185 = pneg %p184
      // Predicated region
      $region9: #{vector_quantize2.1} parent=5 // pred_check
        _
      $region10: #{vector_quantize2.1} parent=5 // pred_check_branch
        %187 = sbr.rel (%p184) target = $region12
      $region11: #{vector_quantize2.1} parent=5 // pred_region
        %s188 = ssub.s32 %s15, 1
        // Predicated region
        $region13: #{vector_quantize2.1} parent=11 // pred_check
          %p189 = pneg %p76
        $region14: #{vector_quantize2.1} parent=11 // pred_check_branch
          %191 = sbr.rel (%p189) target = $region16
        $region15: #{vector_quantize2.1} parent=11 // pred_region
          _
        $region16: #{vector_quantize2.1} parent=11 // pred_fallthru
          _
      $region12: #{vector_quantize2.1} parent=5 // pred_fallthru
        _
      %p192 = scmp.lt.s32.totalorder %s15, 2
      // Predicated region
      $region17: #{vector_quantize2.1} parent=5 // pred_check
        %p193 = pneg %p192
      $region18: #{vector_quantize2.1} parent=5 // pred_check_branch
        %195 = sbr.rel (%p193) target = $region20
      $region19: #{vector_quantize2.1} parent=5 // pred_region
        // Predicated region
        $region21: #{vector_quantize2.1} parent=19 // pred_check
          %p196 = pneg %p49
        $region22: #{vector_quantize2.1} parent=19 // pred_check_branch
          %198 = sbr.rel (%p196) target = $region24
        $region23: #{vector_quantize2.1} parent=19 // pred_region
          %p199 = scmp.lt.s32.totalorder %s22, 1
          %s200 = scalar_select %p199, %s22, 1
          %p201 = scmp.lt.s32.totalorder %s23, 0
          %s202 = scalar_select %p201, %s23, 0
          %s203 = smul.addr %s200, 2
          %s204 = sadd.s32 %s202, %s203
          %s205 = smul.addr %s204, 8
          %s206 = scalar_lea.vmem %s0, %s205
        $region24: #{vector_quantize2.1} parent=19 // pred_fallthru
          _
      $region20: #{vector_quantize2.1} parent=5 // pred_fallthru
        _
      %p207 = scmp.le.s32.totalorder 1, %s15
      %p208 = scmp.lt.s32.totalorder %s15, 3
      %p209 = pnand %p207, %p208
      %p210 = pneg %p209
      // Predicated region
      $region25: #{vector_quantize2.1} parent=5 // pred_check
        _
      $region26: #{vector_quantize2.1} parent=5 // pred_check_branch
        %212 = sbr.rel (%p209) target = $region28
      $region27: #{vector_quantize2.1} parent=5 // pred_region
        %s213 = ssub.s32 %s15, 1
        %p214 = scmp.lt.s32.totalorder %s24, 1
        %s215 = scalar_select %p214, %s24, 1
        %p216 = scmp.lt.s32.totalorder %s25, 0
        %s217 = scalar_select %p216, %s25, 0
        %s218 = smul.addr %s215, 2
        %s219 = sadd.s32 %s217, %s218
        %s220 = smul.addr %s219, 8
        %s221 = scalar_lea.vmem %s0, %s220
        %p222 = pneg %p55
        %p223 = pneg %p52
        %p224 = pneg %p76
        %p225 = pneg %p73
        %p226 = pneg %p104
        %p227 = pneg %p101
        %p228 = scmp.lt.s32.totalorder %s24, 1
        %s229 = scalar_select %p228, %s24, 1
        %p230 = scmp.lt.s32.totalorder %s25, 0
        %s231 = scalar_select %p230, %s25, 0
        %s232 = smul.addr %s229, 2
        %s233 = sadd.s32 %s231, %s232
        %s234 = smul.addr %s233, 8
        %s235 = scalar_lea.vmem %s4, %s234
        %p236 = pneg %p132
        %p237 = pneg %p129
        %p238 = scmp.lt.s32.totalorder %s24, 1
        %s239 = scalar_select %p238, %s24, 1
        %p240 = scmp.lt.s32.totalorder %s25, 0
        %s241 = scalar_select %p240, %s25, 0
        %s242 = sadd.s32 %s241, %s239
        %s243 = scalar_lea.vmem %s5, %s242
        %p244 = pneg %p153
        %p245 = pneg %p150
        %p246 = pneg %p174
        %p247 = pneg %p171
        %p248 = scmp.lt.s32.totalorder %s24, 1
        %s249 = scalar_select %p248, %s24, 1
        %p250 = scmp.lt.s32.totalorder %s25, 0
        %s251 = scalar_select %p250, %s25, 0
        %s252 = smul.addr %s249, 2
        %s253 = sadd.s32 %s251, %s252
        %s254 = smul.addr %s253, 8
        %s255 = scalar_lea.vmem %s0, %s254
        %p256 = scmp.lt.s32.totalorder %s24, 1
        %s257 = scalar_select %p256, %s24, 1
        %p258 = scmp.lt.s32.totalorder %s25, 0
        %s259 = scalar_select %p258, %s25, 0
        %s260 = smul.addr %s257, 2
        %s261 = sadd.s32 %s259, %s260
        %s262 = smul.addr %s261, 8
        %s263 = scalar_lea.vmem %s4, %s262
        %p264 = scmp.lt.s32.totalorder %s24, 1
        %s265 = scalar_select %p264, %s24, 1
        %p266 = scmp.lt.s32.totalorder %s25, 0
        %s267 = scalar_select %p266, %s25, 0
        %s268 = sadd.s32 %s267, %s265
        %s269 = scalar_lea.vmem %s5, %s268
        %p271 = scmp.eq.s32.totalorder %s24, 0
        %p272 = scmp.eq.s32.totalorder %s25, 0
        %p273 = pnand %p271, %p272
        %p274 = pneg %p273
        // Predicated region
        $region29: #{vector_quantize2.1} parent=27 // pred_check
          _
        $region30: #{vector_quantize2.1} parent=27 // pred_check_branch
          %276 = sbr.rel (%p273) target = $region32
        $region31: #{vector_quantize2.1} parent=27 // pred_region
          %p278 = scmp.lt.u32.totalorder 32, 8
          %p279 = pneg %p278
          // Predicated region
          $region33: #{vector_quantize2.1} parent=31 // pred_check
            _
          $region34: #{vector_quantize2.1} parent=31 // pred_check_branch
            %281 = sbr.rel (%p278) target = $region36
          $region35: #{vector_quantize2.1} parent=31 // pred_region
            %s296 = sand.u32 32, 7
            %p297 = scmp.eq.s32.totalorder %s296, 0
            // Predicated region
            $region48: #{vector_quantize2.1} parent=35 // pred_check
              %p298 = pneg %p297
            $region49: #{vector_quantize2.1} parent=35 // pred_check_branch
              %300 = sbr.rel (%p298) target = $region51
            $region50: #{vector_quantize2.1} parent=35 // pred_region
              loop: start=0, step=1, limit=1
              $region52: #{vector_quantize2.1} parent=50 // loop_pre_header
                _
              $region53: #{vector_quantize2.1} parent=50 // loop_header
                %s302 = sphi 0, %s306
                %p303 = scmp.ge.s32.totalorder %s302, 1
                %s307 = sphi %s2, %s2
                %s308 = sphi [#allocation2], [#allocation2]
              $region54: #{vector_quantize2.1} parent=50 // loop_header_branch
                %305 = sbr.rel (%p303) target = $region58
              $region55: #{vector_quantize2.1} parent=50 // loop_body
                %v309 = vld [vmem:[%s307] sm:$0xff]
                %310 = vst [vmem:[%s308] sm:$0xff] %v309
                %v311 = vld [vmem:[%s307 + $0x8] sm:$0xff]
                %312 = vst [vmem:[%s308 + $0x8] sm:$0xff] %v311
                %v313 = vld [vmem:[%s307 + $0x10] sm:$0xff]
                %314 = vst [vmem:[%s308 + $0x10] sm:$0xff] %v313
                %v315 = vld [vmem:[%s307 + $0x18] sm:$0xff]
                %316 = vst [vmem:[%s308 + $0x18] sm:$0xff] %v315
              $region56: #{vector_quantize2.1} parent=50 // loop_footer
                %s306 = sadd.s32 1, %s302
              $region57: #{vector_quantize2.1} parent=50 // loop_footer_branch
                %301 = sbr.rel target = $region53
              $region58: #{vector_quantize2.1} parent=50 // loop_exit
                _
            $region51: #{vector_quantize2.1} parent=35 // pred_fallthru
              _
            %p317 = pneg %p297
            // Predicated region
            $region59: #{vector_quantize2.1} parent=35 // pred_check
              _
            $region60: #{vector_quantize2.1} parent=35 // pred_check_branch
              %319 = sbr.rel (%p297) target = $region62
            $region61: #{vector_quantize2.1} parent=35 // pred_region
              %s320 = sand.u32 32, 7
            $region62: #{vector_quantize2.1} parent=35 // pred_fallthru
              _
          $region36: #{vector_quantize2.1} parent=31 // pred_fallthru
            _
          // Predicated region
          $region37: #{vector_quantize2.1} parent=31 // pred_check
            %p282 = pneg %p278
          $region38: #{vector_quantize2.1} parent=31 // pred_check_branch
            %284 = sbr.rel (%p282) target = $region40
          $region39: #{vector_quantize2.1} parent=31 // pred_region
            %s285 = sshllo.u32 0, 32
            loop: start=0, step=1, limit=1
            $region41: #{vector_quantize2.1} parent=39 // loop_pre_header
              _
            $region42: #{vector_quantize2.1} parent=39 // loop_header
              %s287 = sphi 0, %s291
              %p288 = scmp.ge.s32.totalorder %s287, 1
              %s292 = sphi %s2, %s2
              %s293 = sphi [#allocation2], [#allocation2]
            $region43: #{vector_quantize2.1} parent=39 // loop_header_branch
              %290 = sbr.rel (%p288) target = $region47
            $region44: #{vector_quantize2.1} parent=39 // loop_body
              %v294 = vld [vmem:[%s292] sm:%s285]
              %295 = vst [vmem:[%s293] sm:%s285] %v294
            $region45: #{vector_quantize2.1} parent=39 // loop_footer
              %s291 = sadd.s32 1, %s287
            $region46: #{vector_quantize2.1} parent=39 // loop_footer_branch
              %286 = sbr.rel target = $region42
            $region47: #{vector_quantize2.1} parent=39 // loop_exit
              _
          $region40: #{vector_quantize2.1} parent=31 // pred_fallthru
            _
          // Predicated region
          $region63: #{vector_quantize2.1} parent=31 // pred_check
            _
          $region64: #{vector_quantize2.1} parent=31 // pred_check_branch
            %323 = sbr.rel (0) target = $region66
          $region65: #{vector_quantize2.1} parent=31 // pred_region
            %324 = vsyncadd [#allocation4], 512
          $region66: #{vector_quantize2.1} parent=31 // pred_fallthru
            _
          %s325 = scalar_lea.sflag [#allocation4], 1
          %p327 = scmp.lt.u32.totalorder 24, 8
          %p328 = pneg %p327
          // Predicated region
          $region67: #{vector_quantize2.1} parent=31 // pred_check
            _
          $region68: #{vector_quantize2.1} parent=31 // pred_check_branch
            %330 = sbr.rel (%p327) target = $region70
          $region69: #{vector_quantize2.1} parent=31 // pred_region
            %s345 = sand.u32 24, 7
            %p346 = scmp.eq.s32.totalorder %s345, 0
            // Predicated region
            $region82: #{vector_quantize2.1} parent=69 // pred_check
              %p347 = pneg %p346
            $region83: #{vector_quantize2.1} parent=69 // pred_check_branch
              %349 = sbr.rel (%p347) target = $region85
            $region84: #{vector_quantize2.1} parent=69 // pred_region
              loop: start=0, step=1, limit=1
              $region86: #{vector_quantize2.1} parent=84 // loop_pre_header
                _
              $region87: #{vector_quantize2.1} parent=84 // loop_header
                %s351 = sphi 0, %s355
                %p352 = scmp.ge.s32.totalorder %s351, 1
                %s356 = sphi %s3, %s3
                %s357 = sphi [#allocation3], [#allocation3]
              $region88: #{vector_quantize2.1} parent=84 // loop_header_branch
                %354 = sbr.rel (%p352) target = $region92
              $region89: #{vector_quantize2.1} parent=84 // loop_body
                %v358 = vld [vmem:[%s356] sm:$0xff]
                %359 = vst [vmem:[%s357] sm:$0xff] %v358
                %v360 = vld [vmem:[%s356 + $0x8] sm:$0xff]
                %361 = vst [vmem:[%s357 + $0x8] sm:$0xff] %v360
                %v362 = vld [vmem:[%s356 + $0x10] sm:$0xff]
                %363 = vst [vmem:[%s357 + $0x10] sm:$0xff] %v362
              $region90: #{vector_quantize2.1} parent=84 // loop_footer
                %s355 = sadd.s32 1, %s351
              $region91: #{vector_quantize2.1} parent=84 // loop_footer_branch
                %350 = sbr.rel target = $region87
              $region92: #{vector_quantize2.1} parent=84 // loop_exit
                _
            $region85: #{vector_quantize2.1} parent=69 // pred_fallthru
              _
            %p364 = pneg %p346
            // Predicated region
            $region93: #{vector_quantize2.1} parent=69 // pred_check
              _
            $region94: #{vector_quantize2.1} parent=69 // pred_check_branch
              %366 = sbr.rel (%p346) target = $region96
            $region95: #{vector_quantize2.1} parent=69 // pred_region
              %s367 = sand.u32 24, 7
            $region96: #{vector_quantize2.1} parent=69 // pred_fallthru
              _
          $region70: #{vector_quantize2.1} parent=31 // pred_fallthru
            _
          // Predicated region
          $region71: #{vector_quantize2.1} parent=31 // pred_check
            %p331 = pneg %p327
          $region72: #{vector_quantize2.1} parent=31 // pred_check_branch
            %333 = sbr.rel (%p331) target = $region74
          $region73: #{vector_quantize2.1} parent=31 // pred_region
            %s334 = sshllo.u32 0, 24
            loop: start=0, step=1, limit=1
            $region75: #{vector_quantize2.1} parent=73 // loop_pre_header
              _
            $region76: #{vector_quantize2.1} parent=73 // loop_header
              %s336 = sphi 0, %s340
              %p337 = scmp.ge.s32.totalorder %s336, 1
              %s341 = sphi %s3, %s3
              %s342 = sphi [#allocation3], [#allocation3]
            $region77: #{vector_quantize2.1} parent=73 // loop_header_branch
              %339 = sbr.rel (%p337) target = $region81
            $region78: #{vector_quantize2.1} parent=73 // loop_body
              %v343 = vld [vmem:[%s341] sm:%s334]
              %344 = vst [vmem:[%s342] sm:%s334] %v343
            $region79: #{vector_quantize2.1} parent=73 // loop_footer
              %s340 = sadd.s32 1, %s336
            $region80: #{vector_quantize2.1} parent=73 // loop_footer_branch
              %335 = sbr.rel target = $region76
            $region81: #{vector_quantize2.1} parent=73 // loop_exit
              _
          $region74: #{vector_quantize2.1} parent=31 // pred_fallthru
            _
          // Predicated region
          $region97: #{vector_quantize2.1} parent=31 // pred_check
            _
          $region98: #{vector_quantize2.1} parent=31 // pred_check_branch
            %370 = sbr.rel (0) target = $region100
          $region99: #{vector_quantize2.1} parent=31 // pred_region
            %371 = vsyncadd %s325, 384
          $region100: #{vector_quantize2.1} parent=31 // pred_fallthru
            _
          %s372 = smul.u32 4, 8
          %s373 = smul.u32 %s372, 1
          %s374 = sshll.u32 %s373, 4
          %375 = dma.done [#allocation4], %s374
          %s376 = smul.u32 4, 3
          %s377 = smul.u32 %s376, 2
          %s378 = smul.u32 %s377, 1
          %s379 = sshll.u32 %s378, 4
          %380 = dma.done %s325, %s379
          %vm381 = vcmask 0
          %382 = vst.msk [vmem:[#allocation5] sm:$0x1] %vm381, 0.0
          %vm383 = vcmask 7168
          %384 = vst.msk [vmem:[%s7] sm:$0xff] %vm383, 0.0
          %385 = vst.msk [vmem:[%s7 + $0x8] sm:$0xff] %vm383, 0.0
          %386 = vst.msk [vmem:[%s7 + $0x10] sm:$0xff] %vm383, 0.0
          %387 = vst.msk [vmem:[%s7 + $0x18] sm:$0xff] %vm383, 0.0
          %388 = vst.msk [vmem:[%s7 + $0x20] sm:$0xff] %vm383, 0.0
          %389 = vst.msk [vmem:[%s7 + $0x28] sm:$0xff] %vm383, 0.0
          %390 = vst.msk [vmem:[%s7 + $0x30] sm:$0xff] %vm383, 0.0
          %391 = vst.msk [vmem:[%s7 + $0x38] sm:$0xff] %vm383, 0.0
        $region32: #{vector_quantize2.1} parent=27 // pred_fallthru
          _
        %v392 = vld [vmem:[%s255] sm:$0xff]
        %v393 = vld [vmem:[%s255 + $0x8] sm:$0xff]
        %v394 = vmul.f32 %v392, %v392
        %v395 = vmul.f32 %v393, %v393
        %vm396 = vcmask 523264
        %v397 = vsel %vm396, %v394, 0.0
        %v398 = vsel %vm396, %v395, 0.0
        %v399 = vadd.f32 %v397, %v398
        %v400 = vrot.slane %v399, 4
        %v401 = vadd.f32 %v399, %v400
        %v402 = vrot.slane %v401, 2
        %v403 = vadd.f32 %v401, %v402
        %v404 = vrot.slane %v403, 1
        %v405 = vadd.f32 %v403, %v404
        %v406 = vld [vmem:[#allocation2] sm:$0xff]
        %v407 = vld [vmem:[#allocation2 + $0x8] sm:$0xff]
        %v408 = vld [vmem:[#allocation2 + $0x10] sm:$0xff]
        %v409 = vld [vmem:[#allocation2 + $0x18] sm:$0xff]
        %v410 = vpack.c.bf16 %v393, %v392
        %vm411 = vcmask 130048
        %v413 = vsel %vm411, %v406, 0
        %v416 = vsel %vm411, %v407, 0
        %v419 = vsel %vm411, %v408, 0
        %v422 = vsel %vm411, %v409, 0
        %424 = vmatprep.subr.bf16.mxu0 0
        %425 = vmatpush1.bf16.msra.mxu0 %v410
        %426 = vmatprep.subr.bf16.mxu0 0
        %427 = vmatpush1.bf16.msra.mxu0 0
        %428 = vmatprep.subr.bf16.mxu0 0
        %429 = vmatpush1.bf16.msra.mxu0 0
        %430 = vmatprep.subr.bf16.mxu0 0
        %431 = vmatpush1.bf16.msra.mxu0 0
        %432 = vmatprep.subr.bf16.mxu0 0
        %433 = vmatpush1.bf16.msra.mxu0 0
        %434 = vmatprep.subr.bf16.mxu0 0
        %435 = vmatpush1.bf16.msra.mxu0 0
        %436 = vmatprep.subr.bf16.mxu0 0
        %437 = vmatpush1.bf16.msra.mxu0 0
        %438 = vmatprep.subr.bf16.mxu0 0
        %439 = vmatpush1.bf16.msra.mxu0 0
        %440 = vmatprep.subr.bf16.mxu0 0
        %441 = vmatpush1.bf16.msra.mxu0 0
        %442 = vmatprep.subr.bf16.mxu0 0
        %443 = vmatpush1.bf16.msra.mxu0 0
        %444 = vmatprep.subr.bf16.mxu0 0
        %445 = vmatpush1.bf16.msra.mxu0 0
        %446 = vmatprep.subr.bf16.mxu0 0
        %447 = vmatpush1.bf16.msra.mxu0 0
        %448 = vmatprep.subr.bf16.mxu0 0
        %449 = vmatpush1.bf16.msra.mxu0 0
        %450 = vmatprep.subr.bf16.mxu0 0
        %451 = vmatpush1.bf16.msra.mxu0 0
        %452 = vmatprep.subr.bf16.mxu0 0
        %453 = vmatpush1.bf16.msra.mxu0 0
        %454 = vmatprep.subr.bf16.mxu0 0
        %455 = vmatpush1.bf16.msra.mxu0 0
        %456 = vmatprep.mubr.bf16.mxu0 0
        %457 = vmatmul.mubr.bf16.gmra.mrb[0].mxu0 %v413
        %v458 = vpop.f32.mrb[0].mxu0
        %v459 = vadd.f32 0.0, %v458
        %v460 = vpop.f32.mrb[0].mxu0
        %v461 = vpop.f32.mrb[0].mxu0
        %v462 = vadd.f32 0.0, %v461
        %v463 = vpop.f32.mrb[0].mxu0
        %464 = vmatprep.mubr.bf16.mxu0 0
        %465 = vmatmul.mubr.bf16.gmra.mrb[0].mxu0 %v416
        %v466 = vpop.f32.mrb[0].mxu0
        %v467 = vadd.f32 0.0, %v466
        %v468 = vpop.f32.mrb[0].mxu0
        %v469 = vpop.f32.mrb[0].mxu0
        %v470 = vadd.f32 0.0, %v469
        %v471 = vpop.f32.mrb[0].mxu0
        %472 = vmatprep.mubr.bf16.mxu0 0
        %473 = vmatmul.mubr.bf16.gmra.mrb[0].mxu0 %v419
        %v474 = vpop.f32.mrb[0].mxu0
        %v475 = vadd.f32 0.0, %v474
        %v476 = vpop.f32.mrb[0].mxu0
        %v477 = vpop.f32.mrb[0].mxu0
        %v478 = vadd.f32 0.0, %v477
        %v479 = vpop.f32.mrb[0].mxu0
        %480 = vmatprep.mubr.bf16.mxu0 0
        %481 = vmatmul.mubr.bf16.gmra.mrb[0].mxu0 %v422
        %v482 = vpop.f32.mrb[0].mxu0
        %v483 = vadd.f32 0.0, %v482
        %v484 = vpop.f32.mrb[0].mxu0
        %v485 = vpop.f32.mrb[0].mxu0
        %v486 = vadd.f32 0.0, %v485
        %v487 = vpop.f32.mrb[0].mxu0
        %488 = vdwg.mxu0
        %v489 = vld [vmem:[%s1] sm:$0xff]
        %v490 = vld [vmem:[%s1 + $0x8] sm:$0xff]
        %v491 = vld [vmem:[%s1 + $0x10] sm:$0xff]
        %v492 = vld [vmem:[%s1 + $0x18] sm:$0xff]
        %v493 = vld [vmem:[%s1 + $0x20] sm:$0xff]
        %v494 = vld [vmem:[%s1 + $0x28] sm:$0xff]
        %v495 = vld [vmem:[%s1 + $0x30] sm:$0xff]
        %v496 = vld [vmem:[%s1 + $0x38] sm:$0xff]
        %498 = vset.pattern.permute.xlu0 0
        %499 = vperm.xlu0 %498, %v489
        %v500 = vpop.permute.xlu0 %499
        %503 = vset.pattern.permute.xlu0 0
        %504 = vperm.xlu0 %503, %v490
        %v505 = vpop.permute.xlu0 %504
        %508 = vset.pattern.permute.xlu0 0
        %509 = vperm.xlu0 %508, %v491
        %v510 = vpop.permute.xlu0 %509
        %513 = vset.pattern.permute.xlu0 0
        %514 = vperm.xlu0 %513, %v492
        %v515 = vpop.permute.xlu0 %514
        %518 = vset.pattern.permute.xlu0 0
        %519 = vperm.xlu0 %518, %v493
        %v520 = vpop.permute.xlu0 %519
        %523 = vset.pattern.permute.xlu0 0
        %524 = vperm.xlu0 %523, %v494
        %v525 = vpop.permute.xlu0 %524
        %528 = vset.pattern.permute.xlu0 0
        %529 = vperm.xlu0 %528, %v495
        %v530 = vpop.permute.xlu0 %529
        %533 = vset.pattern.permute.xlu0 0
        %534 = vperm.xlu0 %533, %v496
        %v535 = vpop.permute.xlu0 %534
        %v537 = vadd.f32 %v500, %v405
        %v538 = vadd.f32 %v505, %v405
        %v539 = vadd.f32 %v510, %v405
        %v540 = vadd.f32 %v515, %v405
        %v541 = vadd.f32 %v520, %v405
        %v542 = vadd.f32 %v525, %v405
        %v543 = vadd.f32 %v530, %v405
        %v544 = vadd.f32 %v535, %v405
        %v545 = vmul.f32 %v459, 2.0
        %v546 = vmul.f32 %v462, 2.0
        %v547 = vmul.f32 %v467, 2.0
        %v548 = vmul.f32 %v470, 2.0
        %v549 = vmul.f32 %v475, 2.0
        %v550 = vmul.f32 %v478, 2.0
        %v551 = vmul.f32 %v483, 2.0
        %v552 = vmul.f32 %v486, 2.0
        %v553 = vsub.f32 %v537, %v545
        %v554 = vsub.f32 %v538, %v546
        %v555 = vsub.f32 %v539, %v547
        %v556 = vsub.f32 %v540, %v548
        %v557 = vsub.f32 %v541, %v549
        %v558 = vsub.f32 %v542, %v550
        %v559 = vsub.f32 %v543, %v551
        %v560 = vsub.f32 %v544, %v552
        %v561 = vsel %vm396, %v553, inf
        %v562 = vsel %vm396, %v554, inf
        %v563 = vsel %vm396, %v555, inf
        %v564 = vsel %vm396, %v556, inf
        %v565 = vsel %vm396, %v557, inf
        %v566 = vmin.f32 %v561, %v565
        %v567 = vsel %vm396, %v558, inf
        %v568 = vmin.f32 %v562, %v567
        %v569 = vsel %vm396, %v559, inf
        %v570 = vmin.f32 %v563, %v569
        %v571 = vsel %vm396, %v560, inf
        %v572 = vmin.f32 %v564, %v571
        %v573 = vmin.f32 %v566, %v568
        %v574 = vmin.f32 %v570, %v572
        %v575 = vmin.f32 %v573, %v574
        %v576 = vrot.slane %v575, 4
        %v577 = vmin.f32 %v575, %v576
        %v578 = vrot.slane %v577, 2
        %v579 = vmin.f32 %v577, %v578
        %v580 = vrot.slane %v579, 1
        %v581 = vmin.f32 %v579, %v580
        %v582 = vlaneseq
        %v583 = vshrl.u32 %v582, 7
        %v584 = vadd.s32 %v583, 8
        %v585 = vadd.s32 %v583, 16
        %v586 = vadd.s32 %v583, 24
        %v587 = vadd.s32 %v583, 32
        %v588 = vadd.s32 %v583, 40
        %v589 = vadd.s32 %v583, 48
        %v590 = vadd.s32 %v583, 56
        %vm591 = vcmp.eq.f32.partialorder %v553, %v581
        %vm592 = vcmp.eq.f32.partialorder %v554, %v581
        %vm593 = vcmp.eq.f32.partialorder %v555, %v581
        %vm594 = vcmp.eq.f32.partialorder %v556, %v581
        %vm595 = vcmp.eq.f32.partialorder %v557, %v581
        %vm596 = vcmp.eq.f32.partialorder %v558, %v581
        %vm597 = vcmp.eq.f32.partialorder %v559, %v581
        %vm598 = vcmp.eq.f32.partialorder %v560, %v581
        %v599 = vsel %vm591, %v583, 64
        %v600 = vsel %vm592, %v584, 64
        %v601 = vsel %vm593, %v585, 64
        %v602 = vsel %vm594, %v586, 64
        %v603 = vsel %vm595, %v587, 64
        %v604 = vsel %vm596, %v588, 64
        %v605 = vsel %vm597, %v589, 64
        %v606 = vsel %vm598, %v590, 64
        %v607 = vsel %vm396, %v599, 2147483647
        %v608 = vsel %vm396, %v600, 2147483647
        %v609 = vsel %vm396, %v601, 2147483647
        %v610 = vsel %vm396, %v602, 2147483647
        %v611 = vsel %vm396, %v603, 2147483647
        %vm612 = vcmp.lt.s32.totalorder %v607, %v611
        %v613 = vsel %vm612, %v607, %v611
        %v614 = vsel %vm396, %v604, 2147483647
        %vm615 = vcmp.lt.s32.totalorder %v608, %v614
        %v616 = vsel %vm615, %v608, %v614
        %v617 = vsel %vm396, %v605, 2147483647
        %vm618 = vcmp.lt.s32.totalorder %v609, %v617
        %v619 = vsel %vm618, %v609, %v617
        %v620 = vsel %vm396, %v606, 2147483647
        %vm621 = vcmp.lt.s32.totalorder %v610, %v620
        %v622 = vsel %vm621, %v610, %v620
        %vm623 = vcmp.lt.s32.totalorder %v613, %v616
        %v624 = vsel %vm623, %v613, %v616
        %vm625 = vcmp.lt.s32.totalorder %v619, %v622
        %v626 = vsel %vm625, %v619, %v622
        %vm627 = vcmp.lt.s32.totalorder %v624, %v626
        %v628 = vsel %vm627, %v624, %v626
        %v629 = vrot.slane %v628, 4
        %vm630 = vcmp.lt.s32.totalorder %v628, %v629
        %v631 = vsel %vm630, %v628, %v629
        %v632 = vrot.slane %v631, 2
        %vm633 = vcmp.lt.s32.totalorder %v631, %v632
        %v634 = vsel %vm633, %v631, %v632
        %v635 = vrot.slane %v634, 1
        %vm636 = vcmp.lt.s32.totalorder %v634, %v635
        %v637 = vsel %vm636, %v634, %v635
        %vm638 = vcmp.eq.s32.totalorder %v583, %v637
        %vm639 = vcmp.eq.s32.totalorder %v584, %v637
        %vm640 = vcmp.eq.s32.totalorder %v585, %v637
        %vm641 = vcmp.eq.s32.totalorder %v586, %v637
        %vm642 = vcmp.eq.s32.totalorder %v587, %v637
        %vm643 = vcmp.eq.s32.totalorder %v588, %v637
        %vm644 = vcmp.eq.s32.totalorder %v589, %v637
        %vm645 = vcmp.eq.s32.totalorder %v590, %v637
        %v646 = vsel %vm638, 1, 0
        %v647 = vsel %vm639, 1, 0
        %v648 = vsel %vm640, 1, 0
        %v649 = vsel %vm641, 1, 0
        %v650 = vsel %vm642, 1, 0
        %v651 = vsel %vm643, 1, 0
        %v652 = vsel %vm644, 1, 0
        %v653 = vsel %vm645, 1, 0
        %v654 = vcvt.s32.f32 %v646
        %v655 = vcvt.s32.f32 %v647
        %v656 = vcvt.s32.f32 %v648
        %v657 = vcvt.s32.f32 %v649
        %v658 = vcvt.s32.f32 %v650
        %v659 = vcvt.s32.f32 %v651
        %v660 = vcvt.s32.f32 %v652
        %v661 = vcvt.s32.f32 %v653
        %v662 = vpack.c.bf16 %v655, %v654
        %v663 = vpack.c.bf16 %v657, %v656
        %v664 = vpack.c.bf16 %v659, %v658
        %v665 = vpack.c.bf16 %v661, %v660
        %v666 = vld [vmem:[#allocation3] sm:$0xff]
        %s667 = scalar_lea.vmem [#allocation3], 8
        %v668 = vld [vmem:[%s667] sm:$0xff]
        %v670 = vsel %vm396, %v668, 0
        %672 = vmatprep.subr.bf16.mxu0 0
        %673 = vmatpush1.bf16.msra.mxu0 %v662
        %674 = vmatprep.subr.bf16.mxu0 0
        %675 = vmatpush1.bf16.msra.mxu0 %v663
        %676 = vmatprep.subr.bf16.mxu0 0
        %677 = vmatpush1.bf16.msra.mxu0 %v664
        %678 = vmatprep.subr.bf16.mxu0 0
        %679 = vmatpush1.bf16.msra.mxu0 %v665
        %680 = vmatprep.subr.bf16.mxu0 0
        %681 = vmatpush1.bf16.msra.mxu0 0
        %682 = vmatprep.subr.bf16.mxu0 0
        %683 = vmatpush1.bf16.msra.mxu0 0
        %684 = vmatprep.subr.bf16.mxu0 0
        %685 = vmatpush1.bf16.msra.mxu0 0
        %686 = vmatprep.subr.bf16.mxu0 0
        %687 = vmatpush1.bf16.msra.mxu0 0
        %688 = vmatprep.subr.bf16.mxu0 0
        %689 = vmatpush1.bf16.msra.mxu0 0
        %690 = vmatprep.subr.bf16.mxu0 0
        %691 = vmatpush1.bf16.msra.mxu0 0
        %692 = vmatprep.subr.bf16.mxu0 0
        %693 = vmatpush1.bf16.msra.mxu0 0
        %694 = vmatprep.subr.bf16.mxu0 0
        %695 = vmatpush1.bf16.msra.mxu0 0
        %696 = vmatprep.subr.bf16.mxu0 0
        %697 = vmatpush1.bf16.msra.mxu0 0
        %698 = vmatprep.subr.bf16.mxu0 0
        %699 = vmatpush1.bf16.msra.mxu0 0
        %700 = vmatprep.subr.bf16.mxu0 0
        %701 = vmatpush1.bf16.msra.mxu0 0
        %702 = vmatprep.subr.bf16.mxu0 0
        %703 = vmatpush1.bf16.msra.mxu0 0
        %704 = vmatprep.mubr.bf16.mxu0 0
        %705 = vmatmul.mubr.bf16.gmra.mrb[0].mxu0 %v670
        %v706 = vpop.f32.mrb[0].mxu0
        %v707 = vadd.f32 0.0, %v706
        %v708 = vpop.f32.mrb[0].mxu0
        %v709 = vpop.f32.mrb[0].mxu0
        %v710 = vadd.f32 0.0, %v709
        %v711 = vpop.f32.mrb[0].mxu0
        %712 = vdwg.mxu0
        %v714 = vsel %vm396, %v666, 0
        %716 = vmatprep.subr.bf16.mxu0 0
        %717 = vmatpush1.bf16.msra.mxu0 %v662
        %718 = vmatprep.subr.bf16.mxu0 0
        %719 = vmatpush1.bf16.msra.mxu0 %v663
        %720 = vmatprep.subr.bf16.mxu0 0
        %721 = vmatpush1.bf16.msra.mxu0 %v664
        %722 = vmatprep.subr.bf16.mxu0 0
        %723 = vmatpush1.bf16.msra.mxu0 %v665
        %724 = vmatprep.subr.bf16.mxu0 0
        %725 = vmatpush1.bf16.msra.mxu0 0
        %726 = vmatprep.subr.bf16.mxu0 0
        %727 = vmatpush1.bf16.msra.mxu0 0
        %728 = vmatprep.subr.bf16.mxu0 0
        %729 = vmatpush1.bf16.msra.mxu0 0
        %730 = vmatprep.subr.bf16.mxu0 0
        %731 = vmatpush1.bf16.msra.mxu0 0
        %732 = vmatprep.subr.bf16.mxu0 0
        %733 = vmatpush1.bf16.msra.mxu0 0
        %734 = vmatprep.subr.bf16.mxu0 0
        %735 = vmatpush1.bf16.msra.mxu0 0
        %736 = vmatprep.subr.bf16.mxu0 0
        %737 = vmatpush1.bf16.msra.mxu0 0
        %738 = vmatprep.subr.bf16.mxu0 0
        %739 = vmatpush1.bf16.msra.mxu0 0
        %740 = vmatprep.subr.bf16.mxu0 0
        %741 = vmatpush1.bf16.msra.mxu0 0
        %742 = vmatprep.subr.bf16.mxu0 0
        %743 = vmatpush1.bf16.msra.mxu0 0
        %744 = vmatprep.subr.bf16.mxu0 0
        %745 = vmatpush1.bf16.msra.mxu0 0
        %746 = vmatprep.subr.bf16.mxu0 0
        %747 = vmatpush1.bf16.msra.mxu0 0
        %748 = vmatprep.mubr.bf16.mxu0 0
        %749 = vmatmul.mubr.bf16.gmra.mrb[0].mxu0 %v714
        %v750 = vpop.f32.mrb[0].mxu0
        %v751 = vadd.f32 %v707, %v750
        %v752 = vpop.f32.mrb[0].mxu0
        %v753 = vpop.f32.mrb[0].mxu0
        %v754 = vadd.f32 %v710, %v753
        %v755 = vpop.f32.mrb[0].mxu0
        %756 = vdwg.mxu0
        %s757 = scalar_lea.vmem [#allocation3], 16
        %v758 = vld [vmem:[%s757] sm:$0xff]
        %v760 = vsel %vm396, %v758, 0
        %762 = vmatprep.subr.bf16.mxu0 0
        %763 = vmatpush1.bf16.msra.mxu0 %v662
        %764 = vmatprep.subr.bf16.mxu0 0
        %765 = vmatpush1.bf16.msra.mxu0 %v663
        %766 = vmatprep.subr.bf16.mxu0 0
        %767 = vmatpush1.bf16.msra.mxu0 %v664
        %768 = vmatprep.subr.bf16.mxu0 0
        %769 = vmatpush1.bf16.msra.mxu0 %v665
        %770 = vmatprep.subr.bf16.mxu0 0
        %771 = vmatpush1.bf16.msra.mxu0 0
        %772 = vmatprep.subr.bf16.mxu0 0
        %773 = vmatpush1.bf16.msra.mxu0 0
        %774 = vmatprep.subr.bf16.mxu0 0
        %775 = vmatpush1.bf16.msra.mxu0 0
        %776 = vmatprep.subr.bf16.mxu0 0
        %777 = vmatpush1.bf16.msra.mxu0 0
        %778 = vmatprep.subr.bf16.mxu0 0
        %779 = vmatpush1.bf16.msra.mxu0 0
        %780 = vmatprep.subr.bf16.mxu0 0
        %781 = vmatpush1.bf16.msra.mxu0 0
        %782 = vmatprep.subr.bf16.mxu0 0
        %783 = vmatpush1.bf16.msra.mxu0 0
        %784 = vmatprep.subr.bf16.mxu0 0
        %785 = vmatpush1.bf16.msra.mxu0 0
        %786 = vmatprep.subr.bf16.mxu0 0
        %787 = vmatpush1.bf16.msra.mxu0 0
        %788 = vmatprep.subr.bf16.mxu0 0
        %789 = vmatpush1.bf16.msra.mxu0 0
        %790 = vmatprep.subr.bf16.mxu0 0
        %791 = vmatpush1.bf16.msra.mxu0 0
        %792 = vmatprep.subr.bf16.mxu0 0
        %793 = vmatpush1.bf16.msra.mxu0 0
        %794 = vmatprep.mubr.bf16.mxu0 0
        %795 = vmatmul.mubr.bf16.gmra.mrb[0].mxu0 %v760
        %v796 = vpop.f32.mrb[0].mxu0
        %v797 = vadd.f32 0.0, %v796
        %v798 = vpop.f32.mrb[0].mxu0
        %v799 = vpop.f32.mrb[0].mxu0
        %v800 = vadd.f32 0.0, %v799
        %v801 = vpop.f32.mrb[0].mxu0
        %802 = vdwg.mxu0
        %v803 = vadd.f32 %v751, %v797
        %v804 = vadd.f32 %v754, %v800
        %805 = vst.msk [vmem:[%s263] sm:$0xff] %vm396, %v803
        %806 = vst.msk [vmem:[%s263 + $0x8] sm:$0xff] %vm396, %v804
        %vm807 = vcmask 516096
        %808 = vst.msk [vmem:[%s269] sm:$0x1] %vm807, %v637
        %v809 = vlaneseq
        %v810 = vand.u32 %v809, 127
        %s811 = smul.u32 %s25, 64
        %v812 = vstv %s811
        %v813 = vadd.s32 %v810, %v812
        %vm814 = vcmp.lt.s32.totalorder %v813, 64
        %v815 = vsub.f32 %v803, %v392
        %v816 = vsub.f32 %v804, %v393
        %v817 = vsel %vm814, 1, 0
        %vm818 = vcmp.eq.s32.totalorder %v817, 1
        %v819 = vsel %vm818, %v815, 0.0
        %v820 = vsel %vm818, %v816, 0.0
        %v821 = vld [vmem:[#allocation5] sm:$0x1]
        %v822 = vmul.f32 %v819, %v819
        %v823 = vmul.f32 %v820, %v820
        %v824 = vsel %vm396, %v822, 0.0
        %v825 = vsel %vm396, %v823, 0.0
        %v826 = vadd.f32 %v824, %v825
        %827 = vadd.xlane.f32.xlu0 %v826
        %v828 = vpop.xlane.xlu0 %827
        %v829 = vrot.slane %v828, 4
        %v830 = vadd.f32 %v828, %v829
        %v831 = vrot.slane %v830, 2
        %v832 = vadd.f32 %v830, %v831
        %v833 = vrot.slane %v832, 1
        %v834 = vadd.f32 %v832, %v833
        %s835 = vtos %v834
        %v836 = vstv %s835
        %v837 = vadd.f32 %v821, %v836
        %vm838 = vcmask 0
        %839 = vst.msk [vmem:[#allocation5] sm:$0x1] %vm838, %v837
        %v840 = vld [vmem:[%s7] sm:$0xff]
        %v841 = vld [vmem:[%s7 + $0x8] sm:$0xff]
        %v842 = vld [vmem:[%s7 + $0x10] sm:$0xff]
        %v843 = vld [vmem:[%s7 + $0x18] sm:$0xff]
        %v844 = vld [vmem:[%s7 + $0x20] sm:$0xff]
        %v845 = vld [vmem:[%s7 + $0x28] sm:$0xff]
        %v846 = vld [vmem:[%s7 + $0x30] sm:$0xff]
        %v847 = vld [vmem:[%s7 + $0x38] sm:$0xff]
        %vm848 = vmand %vm638, %vm818
        %vm849 = vmand %vm639, %vm818
        %vm850 = vmand %vm640, %vm818
        %vm851 = vmand %vm641, %vm818
        %vm852 = vmand %vm642, %vm818
        %vm853 = vmand %vm643, %vm818
        %vm854 = vmand %vm644, %vm818
        %vm855 = vmand %vm645, %vm818
        %v856 = vsel %vm848, 1.0, 0.0
        %v857 = vsel %vm849, 1.0, 0.0
        %v858 = vsel %vm850, 1.0, 0.0
        %v859 = vsel %vm851, 1.0, 0.0
        %v860 = vsel %vm852, 1.0, 0.0
        %v861 = vsel %vm853, 1.0, 0.0
        %v862 = vsel %vm854, 1.0, 0.0
        %v863 = vsel %vm855, 1.0, 0.0
        %v864 = vsel %vm396, %v856, 0.0
        %865 = vadd.xlane.f32.xlu0 %v864
        %v866 = vpop.xlane.xlu0 %865
        %v867 = vsel %vm396, %v857, 0.0
        %868 = vadd.xlane.f32.xlu0 %v867
        %v869 = vpop.xlane.xlu0 %868
        %v870 = vsel %vm396, %v858, 0.0
        %871 = vadd.xlane.f32.xlu0 %v870
        %v872 = vpop.xlane.xlu0 %871
        %v873 = vsel %vm396, %v859, 0.0
        %874 = vadd.xlane.f32.xlu0 %v873
        %v875 = vpop.xlane.xlu0 %874
        %v876 = vsel %vm396, %v860, 0.0
        %877 = vadd.xlane.f32.xlu0 %v876
        %v878 = vpop.xlane.xlu0 %877
        %v879 = vsel %vm396, %v861, 0.0
        %880 = vadd.xlane.f32.xlu0 %v879
        %v881 = vpop.xlane.xlu0 %880
        %v882 = vsel %vm396, %v862, 0.0
        %883 = vadd.xlane.f32.xlu0 %v882
        %v884 = vpop.xlane.xlu0 %883
        %v885 = vsel %vm396, %v863, 0.0
        %886 = vadd.xlane.f32.xlu0 %v885
        %v887 = vpop.xlane.xlu0 %886
        %v888 = vadd.f32 %v840, %v866
        %v889 = vadd.f32 %v841, %v869
        %v890 = vadd.f32 %v842, %v872
        %v891 = vadd.f32 %v843, %v875
        %v892 = vadd.f32 %v844, %v878
        %v893 = vadd.f32 %v845, %v881
        %v894 = vadd.f32 %v846, %v884
        %v895 = vadd.f32 %v847, %v887
        %vm896 = vcmask 7168
        %897 = vst.msk [vmem:[%s7] sm:$0xff] %vm896, %v888
        %898 = vst.msk [vmem:[%s7 + $0x8] sm:$0xff] %vm896, %v889
        %899 = vst.msk [vmem:[%s7 + $0x10] sm:$0xff] %vm896, %v890
        %900 = vst.msk [vmem:[%s7 + $0x18] sm:$0xff] %vm896, %v891
        %901 = vst.msk [vmem:[%s7 + $0x20] sm:$0xff] %vm896, %v892
        %902 = vst.msk [vmem:[%s7 + $0x28] sm:$0xff] %vm896, %v893
        %903 = vst.msk [vmem:[%s7 + $0x30] sm:$0xff] %vm896, %v894
        %904 = vst.msk [vmem:[%s7 + $0x38] sm:$0xff] %vm896, %v895
        %p905 = scmp.lt.s32.totalorder %s24, 1
        %s906 = scalar_select %p905, %s24, 1
        %p907 = scmp.lt.s32.totalorder %s25, 0
        %s908 = scalar_select %p907, %s25, 0
        %s909 = smul.addr %s906, 2
        %s910 = sadd.s32 %s908, %s909
        %s911 = smul.addr %s910, 8
        %s912 = scalar_lea.vmem %s4, %s911
        %p913 = scmp.lt.s32.totalorder %s24, 1
        %s914 = scalar_select %p913, %s24, 1
        %p915 = scmp.lt.s32.totalorder %s25, 0
        %s916 = scalar_select %p915, %s25, 0
        %s917 = sadd.s32 %s916, %s914
        %s918 = scalar_lea.vmem %s5, %s917
        // Predicated region
        $region101: #{vector_quantize2.1} parent=27 // pred_check
          %p919 = pneg %p101
        $region102: #{vector_quantize2.1} parent=27 // pred_check_branch
          %921 = sbr.rel (%p919) target = $region104
        $region103: #{vector_quantize2.1} parent=27 // pred_region
          _
        $region104: #{vector_quantize2.1} parent=27 // pred_fallthru
          _
        // Predicated region
        $region105: #{vector_quantize2.1} parent=27 // pred_check
          %p922 = pneg %p129
        $region106: #{vector_quantize2.1} parent=27 // pred_check_branch
          %924 = sbr.rel (%p922) target = $region108
        $region107: #{vector_quantize2.1} parent=27 // pred_region
          _
        $region108: #{vector_quantize2.1} parent=27 // pred_fallthru
          _
        // Predicated region
        $region109: #{vector_quantize2.1} parent=27 // pred_check
          %p925 = pneg %p150
        $region110: #{vector_quantize2.1} parent=27 // pred_check_branch
          %927 = sbr.rel (%p925) target = $region112
        $region111: #{vector_quantize2.1} parent=27 // pred_region
          %s929 = ssub.s32 16, 16
          %930 = vsyncadd [#allocation6], %s929
          %s932 = sshll.u32 [#allocation5], 4
          %s933 = int_to_ptr.vmem [resolvable:$true] %s932
          %935 = dma.vmem_to_hbm [thread:$0]  %s933, 16, %s6, [#allocation6]
        $region112: #{vector_quantize2.1} parent=27 // pred_fallthru
          _
        // Predicated region
        $region113: #{vector_quantize2.1} parent=27 // pred_check
          %p936 = pneg %p171
        $region114: #{vector_quantize2.1} parent=27 // pred_check_branch
          %938 = sbr.rel (%p936) target = $region116
        $region115: #{vector_quantize2.1} parent=27 // pred_region
          _
        $region116: #{vector_quantize2.1} parent=27 // pred_fallthru
          _
        // Predicated region
        $region117: #{vector_quantize2.1} parent=27 // pred_check
          %p939 = pneg %p150
        $region118: #{vector_quantize2.1} parent=27 // pred_check_branch
          %941 = sbr.rel (%p939) target = $region120
        $region119: #{vector_quantize2.1} parent=27 // pred_region
          %942 = dma.done [#allocation6], 16
        $region120: #{vector_quantize2.1} parent=27 // pred_fallthru
          _
        // Predicated region
        $region121: #{vector_quantize2.1} parent=27 // pred_check
          %p943 = pneg %p171
        $region122: #{vector_quantize2.1} parent=27 // pred_check_branch
          %945 = sbr.rel (%p943) target = $region124
        $region123: #{vector_quantize2.1} parent=27 // pred_region
          _
        $region124: #{vector_quantize2.1} parent=27 // pred_fallthru
          _
      $region28: #{vector_quantize2.1} parent=5 // pred_fallthru
        _
      %p946 = scmp.le.s32.totalorder 2, %s15
      // Predicated region
      $region125: #{vector_quantize2.1} parent=5 // pred_check
        %p947 = pneg %p946
      $region126: #{vector_quantize2.1} parent=5 // pred_check_branch
        %949 = sbr.rel (%p947) target = $region128
      $region127: #{vector_quantize2.1} parent=5 // pred_region
        %s950 = ssub.s32 %s15, 2
        // Predicated region
        $region129: #{vector_quantize2.1} parent=127 // pred_check
          %p951 = pneg %p107
        $region130: #{vector_quantize2.1} parent=127 // pred_check_branch
          %953 = sbr.rel (%p951) target = $region132
        $region131: #{vector_quantize2.1} parent=127 // pred_region
          %p954 = scmp.lt.s32.totalorder %s26, 1
          %s955 = scalar_select %p954, %s26, 1
          %p956 = scmp.lt.s32.totalorder %s27, 0
          %s957 = scalar_select %p956, %s27, 0
          %s958 = smul.addr %s955, 2
          %s959 = sadd.s32 %s957, %s958
          %s960 = smul.addr %s959, 8
          %s961 = scalar_lea.vmem %s4, %s960
        $region132: #{vector_quantize2.1} parent=127 // pred_fallthru
          _
        // Predicated region
        $region133: #{vector_quantize2.1} parent=127 // pred_check
          %p962 = pneg %p135
        $region134: #{vector_quantize2.1} parent=127 // pred_check_branch
          %964 = sbr.rel (%p962) target = $region136
        $region135: #{vector_quantize2.1} parent=127 // pred_region
          %p965 = scmp.lt.s32.totalorder %s26, 1
          %s966 = scalar_select %p965, %s26, 1
          %p967 = scmp.lt.s32.totalorder %s27, 0
          %s968 = scalar_select %p967, %s27, 0
          %s969 = sadd.s32 %s968, %s966
          %s970 = scalar_lea.vmem %s5, %s969
        $region136: #{vector_quantize2.1} parent=127 // pred_fallthru
          _
      $region128: #{vector_quantize2.1} parent=5 // pred_fallthru
        _
    $region6: #{vector_quantize2.1} parent=1 // loop_footer
      %s19 = sadd.s32 1, %s15
    $region7: #{vector_quantize2.1} parent=1 // loop_footer_branch
      %14 = sbr.rel target = $region3
    $region8: #{vector_quantize2.1} parent=1 // loop_exit
      _
    %971 = vsyncpa [#allocation6], 1
    %s972 = scalar_lea.sflag [#allocation6], 1
    %973 = vsyncpa %s972, 1
  %974 = vsyncmov [#allocation4]
  %s975 = vpop.sfrf %974
  %p976 = scmp.eq.s32.totalorder %s975, 0
  %p977 = pneg %p976
  %979 = shalt.err (%p977)
  %s980 = scalar_lea.sflag [#allocation4], 1
  %981 = vsyncmov %s980
  %s982 = vpop.sfrf %981
  %p983 = scmp.eq.s32.totalorder %s982, 0
  %p984 = pneg %p983
  %986 = shalt.err (%p984)

</llo_original>
